<compile_context>
chip_gen: v5e
topology: v5e:2x2
jax: 0.10.0
libtpu: 0.0.40
codegen_flags: <defaults>
</compile_context>

<pallas_src>
import math

import jax
import jax.numpy as jnp
from jax import lax
from jax.experimental import pallas as pl
from jax.experimental.pallas import tpu as pltpu


# ----------------------------------------------------------------------------
# Kernel
# ----------------------------------------------------------------------------
def _mulmo_attn_kernel(assis_ref, main_ref,
                       wq_ref, bq_ref, wk_ref, bk_ref, wv_ref, bv_ref,
                       attn_ref, out_ref,
                       k_scratch, v_scratch):
    """One (batch-tile b, q-tile qi) per grid step.

    assis_ref: (bt, tq, C) bf16      main_ref: (bt, Sk, C) bf16
    wq/wk: (C, Ch) bf16 (wq pre-scaled), wv: (C, C) bf16, biases f32
    attn_ref: (bt, tq, Sk) f32       out_ref: (bt, tq, C) f32
    k_scratch: (bt, Sk, Ch) bf16     v_scratch: (bt, Sk, C) bf16
    """
    bt, tq, C = assis_ref.shape
    _, sk, _ = main_ref.shape
    ch = wq_ref.shape[1]

    # k / v: computed once per batch tile (qi == 0), cached in VMEM scratch and
    # reused for the remaining q-tiles (qi axis is "arbitrary" => sequential).
    @pl.when(pl.program_id(1) == 0)
    def _():
        m2 = main_ref[...].reshape(bt * sk, C)                   # one wide MXU matmul
        k = (jnp.dot(m2, wk_ref[...], preferred_element_type=jnp.float32)
             + bk_ref[...])
        v = (jnp.dot(m2, wv_ref[...], preferred_element_type=jnp.float32)
             + bv_ref[...])
        k_scratch[...] = k.reshape(bt, sk, ch).astype(k_scratch.dtype)
        v_scratch[...] = v.reshape(bt, sk, C).astype(v_scratch.dtype)

    # q projection. `scale` is already folded into (wq, bq) by the wrapper.
    a2 = assis_ref[...].reshape(bt * tq, C)
    q = (jnp.dot(a2, wq_ref[...], preferred_element_type=jnp.float32)
         + bq_ref[...]).reshape(bt, tq, ch).astype(jnp.bfloat16)

    # Scores: contract the shared Ch axis directly (no explicit k^T, no XLU
    # transpose); batched over bt; bf16 operands, f32 accumulation.
    dots = lax.dot_general(
        q, k_scratch[...],
        dimension_numbers=(((2,), (2,)), ((0,), (0,))),
        preferred_element_type=jnp.float32)                      # (bt, tq, sk) f32

    # Numerically stable softmax, kept in f32 (v5e has no bf16 VPU/EUP). Exact
    # division so the returned attention weights sum to 1.
    dots = dots - jnp.max(dots, axis=-1, keepdims=True)
    e = jnp.exp(dots)
    attn = e / jnp.sum(e, axis=-1, keepdims=True)

    out = lax.dot_general(
        attn.astype(jnp.bfloat16), v_scratch[...],
        dimension_numbers=(((2,), (1,)), ((0,), (0,))),
        preferred_element_type=jnp.float32)                      # (bt, tq, C) f32

    # TODO(synk): make the (B, Sq, Sk) attn output optional / bf16 when the
    # caller only consumes `out` -- it is the largest HBM writeback here.
    attn_ref[...] = attn.astype(attn_ref.dtype)
    out_ref[...] = out.astype(out_ref.dtype)


# ----------------------------------------------------------------------------
# VMEM sizing helpers
# ----------------------------------------------------------------------------
def _round_up(x, m):
    return ((x + m - 1) // m) * m


def _padded_bytes(shape, dtype):
    """Bytes of a VMEM buffer after (sublane, lane) tile padding."""
    itemsize = jnp.dtype(dtype).itemsize
    sublane = {4: 8, 2: 16, 1: 32}.get(itemsize, 8)
    if len(shape) == 0:
        return itemsize
    if len(shape) == 1:
        return _round_up(shape[0], 128) * itemsize
    lead = 1
    for d in shape[:-2]:
        lead *= d
    return lead * _round_up(shape[-2], sublane) * _round_up(shape[-1], 128) * itemsize


def _vmem_capacity_bytes():
    """Physical VMEM of the attached TPU; conservative 64 MiB fallback."""
    try:
        cap = getattr(pltpu.get_tpu_info(), "vmem_capacity_bytes", None)
        if cap:
            return int(cap)
    except Exception:
        pass
    return 64 << 20


def _pick_batch_tile(B, n_q_blocks, per_batch_bytes, weight_bytes, budget_bytes):
    """Largest divisor of B whose per-step footprint fits the VMEM budget, while
    keeping >= 2 total grid steps when there are >= 2 units of work (so the
    'parallel' batch axis can feed both TensorCores on v7x)."""
    best = 1
    for cand in range(1, B + 1):
        if B % cand:
            continue
        if cand * per_batch_bytes + weight_bytes > budget_bytes:
            break
        total_steps = (B // cand) * n_q_blocks
        if total_steps >= 2 or B * n_q_blocks < 2:
            best = cand
    return best


# ----------------------------------------------------------------------------
# Wrapper
# ----------------------------------------------------------------------------
def mulmo_attn(assis, main, wq, bq, wk, bk, wv, bv, scale,
               *, bt=None, tq=None, vmem_budget_bytes=None,
               single_buffer_weights=True):
    """assis: (B, Sq, C), main: (B, Sk, C). Weights are (in, out), biases (1, out)."""
    B, Sq, C = assis.shape
    Bm, Sk, Cm = main.shape
    assert Bm == B and Cm == C
    Ch = wq.shape[1]

    f32, bf16 = jnp.float32, jnp.bfloat16

    # One-time weight prep: fold the softmax scale into the q projection
    # (dots = (a @ (Wq*s) + bq*s) . k == s * (q . k)), then cast weights and
    # activations to bf16 so every matmul uses the MXU bf16 path with f32
    # accumulation. Biases stay f32.
    wq_s = (wq.astype(f32) * scale).astype(bf16)
    bq_s = bq.astype(f32) * scale
    wk_b, wv_b = wk.astype(bf16), wv.astype(bf16)
    bk_f, bv_f = bk.astype(f32), bv.astype(f32)
    assis_b, main_b = assis.astype(bf16), main.astype(bf16)

    # q-tile size (second grid axis). Whole Sq when small; otherwise a divisor
    # >= 256 preferred (v6e/v7x MXUs are 256-wide; 128 only as a last resort).
    # If Sq is large and indivisible we fall back to tq = Sq (whole score rows
    # in VMEM) -- acceptable at the shapes this module is used with.
    if tq is None:
        tq = Sq
        if Sq > 512:
            for cand in (512, 256, 128):
                if Sq % cand == 0:
                    tq = cand
                    break
    assert Sq % tq == 0, "tq must divide Sq"
    n_q_blocks = Sq // tq
    # TODO(synk): for very long Sk add a third ("arbitrary") Sk-reduction grid
    # axis with an online-softmax (flash) accumulator instead of keeping the
    # whole (bt, Sk, C) main block + cached k/v resident; not needed here.

    # Generation-aware VMEM budget: ~half of physical (32 MiB on v7x's 64 MiB,
    # 64 MiB on v5e/v6e's 128 MiB), capped at 96 MiB.
    vmem_cap = _vmem_capacity_bytes()
    if vmem_budget_bytes is None:
        vmem_budget_bytes = min(max(vmem_cap // 2, 16 << 20), 96 << 20)

    wbuf = 1 if single_buffer_weights else 2
    weight_bytes = wbuf * (2 * _padded_bytes((C, Ch), bf16)
                           + _padded_bytes((C, C), bf16)
                           + 2 * _padded_bytes((1, Ch), f32)
                           + _padded_bytes((1, C), f32))
    per_batch = (
        # double-buffered pipelined input / output blocks (per unit of bt)
        2 * (_padded_bytes((tq, C), bf16) + _padded_bytes((Sk, C), bf16)
             + _padded_bytes((tq, Sk), f32) + _padded_bytes((tq, C), f32))
        # cached k / v scratch (single copy, persists across q-tiles)
        + _padded_bytes((Sk, Ch), bf16) + _padded_bytes((Sk, C), bf16)
        # live intermediates: q, dots/e/attn, out
        + _padded_bytes((tq, Ch), bf16) + 3 * _padded_bytes((tq, Sk), f32)
        + _padded_bytes((tq, C), f32))

    if bt is None:
        bt = _pick_batch_tile(B, n_q_blocks, per_batch, weight_bytes,
                              vmem_budget_bytes)
    assert B % bt == 0, "bt must divide B"

    vmem_est = bt * per_batch + weight_bytes
    vmem_limit = None
    if vmem_est > (16 << 20):
        # Raise the scoped-VMEM limit but keep it safely below physical VMEM.
        vmem_limit = min(max(int(vmem_est * 2), 32 << 20), (vmem_cap * 3) // 4)

    compiler_params = pltpu.CompilerParams(
        # batch axis parallel (megacore); q-tile axis MUST be arbitrary because
        # the cached k/v scratch is reused across q-tiles.
        dimension_semantics=("parallel", "arbitrary"),
        vmem_limit_bytes=vmem_limit,
    )

    # Constant-index weight blocks: single-buffered (double-buffering them is
    # pure VMEM waste since their block index never changes).
    wmode = pl.Buffered(buffer_count=1) if single_buffer_weights else None

    grid = (B // bt, n_q_blocks)
    grid_spec = pltpu.PrefetchScalarGridSpec(
        num_scalar_prefetch=0,
        grid=grid,
        in_specs=[
            pl.BlockSpec((bt, tq, C), lambda b, qi: (b, qi, 0)),   # assis
            pl.BlockSpec((bt, Sk, C), lambda b, qi: (b, 0, 0)),    # main (DMA'd once per batch tile)
            pl.BlockSpec((C, Ch), lambda b, qi: (0, 0), pipeline_mode=wmode),  # Wq (pre-scaled)
            pl.BlockSpec((1, Ch), lambda b, qi: (0, 0), pipeline_mode=wmode),  # bq (pre-scaled)
            pl.BlockSpec((C, Ch), lambda b, qi: (0, 0), pipeline_mode=wmode),  # Wk
            pl.BlockSpec((1, Ch), lambda b, qi: (0, 0), pipeline_mode=wmode),  # bk
            pl.BlockSpec((C, C), lambda b, qi: (0, 0), pipeline_mode=wmode),   # Wv
            pl.BlockSpec((1, C), lambda b, qi: (0, 0), pipeline_mode=wmode),   # bv
        ],
        out_specs=[
            pl.BlockSpec((bt, tq, Sk), lambda b, qi: (b, qi, 0)),  # attn
            pl.BlockSpec((bt, tq, C), lambda b, qi: (b, qi, 0)),   # out
        ],
        scratch_shapes=[
            pltpu.VMEM((bt, Sk, Ch), bf16),   # cached k
            pltpu.VMEM((bt, Sk, C), bf16),    # cached v
        ],
    )

    return pl.pallas_call(
        _mulmo_attn_kernel,
        grid_spec=grid_spec,
        out_shape=(
            jax.ShapeDtypeStruct((B, Sq, Sk), jnp.float32),
            jax.ShapeDtypeStruct((B, Sq, C), jnp.float32),
        ),
        compiler_params=compiler_params,
    )(assis_b, main_b, wq_s, bq_s, wk_b, bk_f, wv_b, bv_f)


# ----------------------------------------------------------------------------
# Pure-JAX reference (module semantics). matmul_dtype=bf16 reproduces the
# kernel's MXU precision (bf16 operands, f32 accumulation) for a tight check.
# ----------------------------------------------------------------------------
def mulmo_attn_ref(assis, main, wq, bq, wk, bk, wv, bv, scale,
                   *, matmul_dtype=jnp.float32):
    md, f32 = matmul_dtype, jnp.float32
    q = jnp.dot(assis.astype(md), wq.astype(md), preferred_element_type=f32) + bq
    k = jnp.dot(main.astype(md), wk.astype(md), preferred_element_type=f32) + bk
    v = jnp.dot(main.astype(md), wv.astype(md), preferred_element_type=f32) + bv
    dots = jnp.einsum("bqd,bkd->bqk", q.astype(md), k.astype(md),
                      preferred_element_type=f32) * scale
    attn = jax.nn.softmax(dots, axis=-1)
    out = jnp.einsum("bqk,bkc->bqc", attn.astype(md), v.astype(md),
                     preferred_element_type=f32)
    return attn, out


if __name__ == "__main__":
    # Small shapes consistent with the module's forward.
    B, Sq, Sk, C = 2, 8, 8, 32
    Ch = C // 2
    scale_para = -0.5                      # args.scale_para
    scale = float(Ch ** scale_para)        # (in_channels // 2) ** scale_para

    key = jax.random.PRNGKey(0)
    k_assis, k_main, k_wq, k_wk, k_wv, k_bq, k_bk, k_bv = jax.random.split(key, 8)

    assis = jax.random.normal(k_assis, (B, Sq, C), dtype=jnp.float32)
    main = jax.random.normal(k_main, (B, Sk, C), dtype=jnp.float32)

    # Parameter init mirroring the module's __init__ (weights stored (in, out)
    # so the kernel does x @ W == PyTorch x @ W^T):
    wq = jax.random.normal(k_wq, (C, Ch), dtype=jnp.float32) * math.sqrt(2.0 / Ch)
    wk = jax.random.normal(k_wk, (C, Ch), dtype=jnp.float32) * math.sqrt(2.0 / Ch)
    wv = jax.random.normal(k_wv, (C, C), dtype=jnp.float32) * math.sqrt(2.0 / C)
    bound = 1.0 / math.sqrt(C)             # PyTorch Linear default bias init
    bq = jax.random.uniform(k_bq, (1, Ch), minval=-bound, maxval=bound, dtype=jnp.float32)
    bk = jax.random.uniform(k_bk, (1, Ch), minval=-bound, maxval=bound, dtype=jnp.float32)
    bv = jax.random.uniform(k_bv, (1, C), minval=-bound, maxval=bound, dtype=jnp.float32)

    attn, out = mulmo_attn(assis, main, wq, bq, wk, bk, wv, bv, scale)
    attn, out = jax.block_until_ready((attn, out))

    # Precision-matched reference: same math as the PyTorch module, with each
    # matmul's operands rounded to bf16 (f32 accumulation) exactly like the
    # kernel's MXU path, so only accumulation-order noise remains.
    attn_r, out_r = mulmo_attn_ref(assis, main, wq, bq, wk, bk, wv, bv, scale,
                                   matmul_dtype=jnp.bfloat16)
    assert jnp.allclose(attn, attn_r, atol=1e-2, rtol=1e-2), "attn mismatch"
    assert jnp.allclose(out, out_r, atol=1e-2, rtol=1e-2), "out mismatch"

    print("KERNEL_OK")
</pallas_src>

<mosaic_0001>
module attributes {stable_mosaic.version = 11 : i64} {
  func.func @_mulmo_attn_kernel(%arg0: i32, %arg1: i32, %arg2: memref<1x8x32xbf16, #tpu.memory_space<vmem>>, %arg3: memref<1x8x32xbf16, #tpu.memory_space<vmem>>, %arg4: memref<32x16xbf16, #tpu.memory_space<vmem>>, %arg5: memref<1x16xf32, #tpu.memory_space<vmem>>, %arg6: memref<32x16xbf16, #tpu.memory_space<vmem>>, %arg7: memref<1x16xf32, #tpu.memory_space<vmem>>, %arg8: memref<32x32xbf16, #tpu.memory_space<vmem>>, %arg9: memref<1x32xf32, #tpu.memory_space<vmem>>, %arg10: memref<1x8x8xf32, #tpu.memory_space<vmem>>, %arg11: memref<1x8x32xf32, #tpu.memory_space<vmem>>, %arg12: memref<1x8x16xbf16, #tpu.memory_space<vmem>>, %arg13: memref<1x8x32xbf16, #tpu.memory_space<vmem>>) attributes {dimension_semantics = [#tpu.dimension_semantics<parallel>, #tpu.dimension_semantics<arbitrary>], iteration_bounds = array<i64: 2, 1>, scalar_prefetch = 0 : i64, scratch_operands = 2 : i64, tpu.core_type = #tpu.core_type<tc>, window_params = [{transform_indices = @transform_0, window_bounds = array<i64: 1, 8, 32>}, {transform_indices = @transform_1, window_bounds = array<i64: 1, 8, 32>}, {pipeline_mode = #tpu.pipeline_mode<synchronous>, transform_indices = @transform_2, window_bounds = array<i64: 32, 16>}, {pipeline_mode = #tpu.pipeline_mode<synchronous>, transform_indices = @transform_3, window_bounds = array<i64: 1, 16>}, {pipeline_mode = #tpu.pipeline_mode<synchronous>, transform_indices = @transform_4, window_bounds = array<i64: 32, 16>}, {pipeline_mode = #tpu.pipeline_mode<synchronous>, transform_indices = @transform_5, window_bounds = array<i64: 1, 16>}, {pipeline_mode = #tpu.pipeline_mode<synchronous>, transform_indices = @transform_6, window_bounds = array<i64: 32, 32>}, {pipeline_mode = #tpu.pipeline_mode<synchronous>, transform_indices = @transform_7, window_bounds = array<i64: 1, 32>}, {transform_indices = @transform_8, window_bounds = array<i64: 1, 8, 8>}, {transform_indices = @transform_9, window_bounds = array<i64: 1, 8, 32>}]} {
    %c0_i32 = arith.constant 0 : i32
    %0 = arith.cmpi eq, %arg1, %c0_i32 : i32
    %1 = arith.extui %0 : i1 to i32
    %c0_i32_0 = arith.constant 0 : i32
    %2 = arith.cmpi ne, %1, %c0_i32_0 : i32
    scf.if %2 {
      %c0_23 = arith.constant 0 : index
      %c0_24 = arith.constant 0 : index
      %c0_25 = arith.constant 0 : index
      %28 = vector.load %arg3[%c0_23, %c0_24, %c0_25] : memref<1x8x32xbf16, #tpu.memory_space<vmem>>, vector<1x8x32xbf16>
      %29 = vector.shape_cast %28 : vector<1x8x32xbf16> to vector<8x32xbf16>
      %c0_26 = arith.constant 0 : index
      %c0_27 = arith.constant 0 : index
      %30 = vector.load %arg6[%c0_26, %c0_27] : memref<32x16xbf16, #tpu.memory_space<vmem>>, vector<32x16xbf16>
      %cst_28 = arith.constant dense<0.000000e+00> : vector<8x16xf32>
      %31 = tpu.matmul %29, %30, %cst_28 {dimension_numbers = #tpu.dot_dimension_numbers<[1], [0], [0], [1], [0, 0, 1, 1], [], []>} : vector<8x32xbf16>, vector<32x16xbf16>, vector<8x16xf32> -> vector<8x16xf32>
      %c0_29 = arith.constant 0 : index
      %c0_30 = arith.constant 0 : index
      %32 = vector.load %arg7[%c0_29, %c0_30] : memref<1x16xf32, #tpu.memory_space<vmem>>, vector<1x16xf32>
      %33 = vector.broadcast %32 : vector<1x16xf32> to vector<8x16xf32>
      %34 = arith.addf %31, %33 : vector<8x16xf32>
      %c0_31 = arith.constant 0 : index
      %c0_32 = arith.constant 0 : index
      %35 = vector.load %arg8[%c0_31, %c0_32] : memref<32x32xbf16, #tpu.memory_space<vmem>>, vector<32x32xbf16>
      %cst_33 = arith.constant dense<0.000000e+00> : vector<8x32xf32>
      %36 = tpu.matmul %29, %35, %cst_33 {dimension_numbers = #tpu.dot_dimension_numbers<[1], [0], [0], [1], [0, 0, 1, 1], [], []>} : vector<8x32xbf16>, vector<32x32xbf16>, vector<8x32xf32> -> vector<8x32xf32>
      %c0_34 = arith.constant 0 : index
      %c0_35 = arith.constant 0 : index
      %37 = vector.load %arg9[%c0_34, %c0_35] : memref<1x32xf32, #tpu.memory_space<vmem>>, vector<1x32xf32>
      %38 = vector.broadcast %37 : vector<1x32xf32> to vector<8x32xf32>
      %39 = arith.addf %36, %38 : vector<8x32xf32>
      %40 = vector.shape_cast %34 : vector<8x16xf32> to vector<1x8x16xf32>
      %41 = arith.truncf %40 : vector<1x8x16xf32> to vector<1x8x16xbf16>
      %c0_36 = arith.constant 0 : index
      %c0_37 = arith.constant 0 : index
      %c0_38 = arith.constant 0 : index
      %42 = vector.load %arg12[%c0_36, %c0_37, %c0_38] : memref<1x8x16xbf16, #tpu.memory_space<vmem>>, vector<1x8x16xbf16>
      tpu.vector_store %arg12[%c0_36, %c0_37, %c0_38], %41 {strides = array<i32>} : memref<1x8x16xbf16, #tpu.memory_space<vmem>>, vector<1x8x16xbf16>,
      %43 = vector.shape_cast %39 : vector<8x32xf32> to vector<1x8x32xf32>
      %44 = arith.truncf %43 : vector<1x8x32xf32> to vector<1x8x32xbf16>
      %c0_39 = arith.constant 0 : index
      %c0_40 = arith.constant 0 : index
      %c0_41 = arith.constant 0 : index
      %45 = vector.load %arg13[%c0_39, %c0_40, %c0_41] : memref<1x8x32xbf16, #tpu.memory_space<vmem>>, vector<1x8x32xbf16>
      tpu.vector_store %arg13[%c0_39, %c0_40, %c0_41], %44 {strides = array<i32>} : memref<1x8x32xbf16, #tpu.memory_space<vmem>>, vector<1x8x32xbf16>,
    } else {
    }
    %c0 = arith.constant 0 : index
    %c0_1 = arith.constant 0 : index
    %c0_2 = arith.constant 0 : index
    %3 = vector.load %arg2[%c0, %c0_1, %c0_2] : memref<1x8x32xbf16, #tpu.memory_space<vmem>>, vector<1x8x32xbf16>
    %4 = vector.shape_cast %3 : vector<1x8x32xbf16> to vector<8x32xbf16>
    %c0_3 = arith.constant 0 : index
    %c0_4 = arith.constant 0 : index
    %5 = vector.load %arg4[%c0_3, %c0_4] : memref<32x16xbf16, #tpu.memory_space<vmem>>, vector<32x16xbf16>
    %cst = arith.constant dense<0.000000e+00> : vector<8x16xf32>
    %6 = tpu.matmul %4, %5, %cst {dimension_numbers = #tpu.dot_dimension_numbers<[1], [0], [0], [1], [0, 0, 1, 1], [], []>} : vector<8x32xbf16>, vector<32x16xbf16>, vector<8x16xf32> -> vector<8x16xf32>
    %c0_5 = arith.constant 0 : index
    %c0_6 = arith.constant 0 : index
    %7 = vector.load %arg5[%c0_5, %c0_6] : memref<1x16xf32, #tpu.memory_space<vmem>>, vector<1x16xf32>
    %8 = vector.broadcast %7 : vector<1x16xf32> to vector<8x16xf32>
    %9 = arith.addf %6, %8 : vector<8x16xf32>
    %10 = vector.shape_cast %9 : vector<8x16xf32> to vector<1x8x16xf32>
    %11 = arith.truncf %10 : vector<1x8x16xf32> to vector<1x8x16xbf16>
    %c0_7 = arith.constant 0 : index
    %c0_8 = arith.constant 0 : index
    %c0_9 = arith.constant 0 : index
    %12 = vector.load %arg12[%c0_7, %c0_8, %c0_9] : memref<1x8x16xbf16, #tpu.memory_space<vmem>>, vector<1x8x16xbf16>
    %cst_10 = arith.constant dense<0.000000e+00> : vector<1x8x8xf32>
    %13 = tpu.matmul %11, %12, %cst_10 {dimension_numbers = #tpu.dot_dimension_numbers<[2], [2], [1], [1], [0, 0, 0, 1, 1, 1], [0], [0]>} : vector<1x8x16xbf16>, vector<1x8x16xbf16>, vector<1x8x8xf32> -> vector<1x8x8xf32>
    %cst_11 = arith.constant dense<0xFF800000> : vector<1x8xf32>
    %14 = vector.multi_reduction <maximumf>, %13, %cst_11 [2] : vector<1x8x8xf32> to vector<1x8xf32>
    %15 = vector.shape_cast %14 : vector<1x8xf32> to vector<1x8x1xf32>
    %16 = vector.broadcast %15 : vector<1x8x1xf32> to vector<1x8x8xf32>
    %17 = arith.subf %13, %16 : vector<1x8x8xf32>
    %18 = math.exp %17 : vector<1x8x8xf32>
    %cst_12 = arith.constant dense<0.000000e+00> : vector<1x8xf32>
    %19 = vector.multi_reduction <add>, %18, %cst_12 [2] : vector<1x8x8xf32> to vector<1x8xf32>
    %20 = vector.shape_cast %19 : vector<1x8xf32> to vector<1x8x1xf32>
    %21 = vector.broadcast %20 : vector<1x8x1xf32> to vector<1x8x8xf32>
    %22 = arith.divf %18, %21 : vector<1x8x8xf32>
    %23 = arith.truncf %22 : vector<1x8x8xf32> to vector<1x8x8xbf16>
    %c0_13 = arith.constant 0 : index
    %c0_14 = arith.constant 0 : index
    %c0_15 = arith.constant 0 : index
    %24 = vector.load %arg13[%c0_13, %c0_14, %c0_15] : memref<1x8x32xbf16, #tpu.memory_space<vmem>>, vector<1x8x32xbf16>
    %cst_16 = arith.constant dense<0.000000e+00> : vector<1x8x32xf32>
    %25 = tpu.matmul %23, %24, %cst_16 {dimension_numbers = #tpu.dot_dimension_numbers<[2], [1], [1], [2], [0, 0, 0, 1, 1, 2], [0], [0]>} : vector<1x8x8xbf16>, vector<1x8x32xbf16>, vector<1x8x32xf32> -> vector<1x8x32xf32>
    %c0_17 = arith.constant 0 : index
    %c0_18 = arith.constant 0 : index
    %c0_19 = arith.constant 0 : index
    %26 = vector.load %arg10[%c0_17, %c0_18, %c0_19] : memref<1x8x8xf32, #tpu.memory_space<vmem>>, vector<1x8x8xf32>
    tpu.vector_store %arg10[%c0_17, %c0_18, %c0_19], %22 {strides = array<i32>} : memref<1x8x8xf32, #tpu.memory_space<vmem>>, vector<1x8x8xf32>,
    %c0_20 = arith.constant 0 : index
    %c0_21 = arith.constant 0 : index
    %c0_22 = arith.constant 0 : index
    %27 = vector.load %arg11[%c0_20, %c0_21, %c0_22] : memref<1x8x32xf32, #tpu.memory_space<vmem>>, vector<1x8x32xf32>
    tpu.vector_store %arg11[%c0_20, %c0_21, %c0_22], %25 {strides = array<i32>} : memref<1x8x32xf32, #tpu.memory_space<vmem>>, vector<1x8x32xf32>,
    return
  }
  func.func @transform_0(%arg0: i32, %arg1: i32) -> (i32, i32, i32) {
    %c0_i32 = arith.constant 0 : i32
    %c0_i32_0 = arith.constant 0 : i32
    return %arg0, %arg1, %c0_i32 : i32, i32, i32
  }
  func.func @transform_1(%arg0: i32, %arg1: i32) -> (i32, i32, i32) {
    %c0_i32 = arith.constant 0 : i32
    %c0_i32_0 = arith.constant 0 : i32
    %c0_i32_1 = arith.constant 0 : i32
    return %arg0, %c0_i32, %c0_i32_0 : i32, i32, i32
  }
  func.func @transform_2(%arg0: i32, %arg1: i32) -> (i32, i32) {
    %c0_i32 = arith.constant 0 : i32
    %c0_i32_0 = arith.constant 0 : i32
    %c0_i32_1 = arith.constant 0 : i32
    return %c0_i32, %c0_i32_0 : i32, i32
  }
  func.func @transform_3(%arg0: i32, %arg1: i32) -> (i32, i32) {
    %c0_i32 = arith.constant 0 : i32
    %c0_i32_0 = arith.constant 0 : i32
    %c0_i32_1 = arith.constant 0 : i32
    return %c0_i32, %c0_i32_0 : i32, i32
  }
  func.func @transform_4(%arg0: i32, %arg1: i32) -> (i32, i32) {
    %c0_i32 = arith.constant 0 : i32
    %c0_i32_0 = arith.constant 0 : i32
    %c0_i32_1 = arith.constant 0 : i32
    return %c0_i32, %c0_i32_0 : i32, i32
  }
  func.func @transform_5(%arg0: i32, %arg1: i32) -> (i32, i32) {
    %c0_i32 = arith.constant 0 : i32
    %c0_i32_0 = arith.constant 0 : i32
    %c0_i32_1 = arith.constant 0 : i32
    return %c0_i32, %c0_i32_0 : i32, i32
  }
  func.func @transform_6(%arg0: i32, %arg1: i32) -> (i32, i32) {
    %c0_i32 = arith.constant 0 : i32
    %c0_i32_0 = arith.constant 0 : i32
    %c0_i32_1 = arith.constant 0 : i32
    return %c0_i32, %c0_i32_0 : i32, i32
  }
  func.func @transform_7(%arg0: i32, %arg1: i32) -> (i32, i32) {
    %c0_i32 = arith.constant 0 : i32
    %c0_i32_0 = arith.constant 0 : i32
    %c0_i32_1 = arith.constant 0 : i32
    return %c0_i32, %c0_i32_0 : i32, i32
  }
  func.func @transform_8(%arg0: i32, %arg1: i32) -> (i32, i32, i32) {
    %c0_i32 = arith.constant 0 : i32
    %c0_i32_0 = arith.constant 0 : i32
    return %arg0, %arg1, %c0_i32 : i32, i32, i32
  }
  func.func @transform_9(%arg0: i32, %arg1: i32) -> (i32, i32, i32) {
    %c0_i32 = arith.constant 0 : i32
    %c0_i32_0 = arith.constant 0 : i32
    return %arg0, %arg1, %c0_i32 : i32, i32, i32
  }
}

</mosaic_0001>

<llo_original>
// kernel: tpu_custom_call.1
$region0: #{tpu_custom_call.1}
  #allocation0 [shape = 'u32[]', space=smem, size = 0x4, offset = 0x4, fixed_abs, tag = 'smem constant byte address 0x4 - core index']
  #allocation1 [shape = 'u32[72,128]{1,0:T(1,128)}', space=vmem, size = 0x9000, scoped, tag = 'internal scratch']
  #allocation2 [shape = 'bf16[1,8,16]{2,1,0:T(8,128)(2,1)}', space=vmem, size = 0x800, scoped, tag = 'scratch operand']
  #allocation3 [shape = 'bf16[1,8,32]{2,1,0:T(8,128)(2,1)}', space=vmem, size = 0x800, scoped, tag = 'scratch operand']
  %s0 = inlined_call_operand.vmem [shape: bf16[2,8,32], index: 0, kind: input, shape index: {}]
  %s1 = inlined_call_operand.vmem [shape: bf16[2,8,32], index: 1, kind: input, shape index: {}]
  %s2 = inlined_call_operand.vmem [shape: bf16[32,16], index: 2, kind: input, shape index: {}]
  %s3 = inlined_call_operand.vmem [shape: f32[1,16], index: 3, kind: input, shape index: {}]
  %s4 = inlined_call_operand.vmem [shape: bf16[32,16], index: 4, kind: input, shape index: {}]
  %s5 = inlined_call_operand.vmem [shape: f32[1,16], index: 5, kind: input, shape index: {}]
  %s6 = inlined_call_operand.vmem [shape: bf16[32,32], index: 6, kind: input, shape index: {}]
  %s7 = inlined_call_operand.vmem [shape: f32[1,32], index: 7, kind: input, shape index: {}]
  %s8 = inlined_call_operand.hbm [shape: f32[2,8,8], index: 8, kind: output, shape index: {0}]
  %s9 = inlined_call_operand.hbm [shape: f32[2,8,32], index: 9, kind: output, shape index: {1}]
  %10 = xla_tuple %s8, %s9
  %s11 = sld [smem:[#allocation0]]
  $region77: #{tpu_custom_call.1} parent=0
    _
  %s13 = ssub.s32 1, %s11
  %s14 = scalar_select 0, %s13, %s11
  $region1: #{tpu_custom_call.1} parent=0
    #allocation4 [shape = 'u8[8192]{0}', space=vmem, size = 0x2000, scoped, tag = 'output window, operand 0']
    #allocation5 [shape = 's32[2]{0}', space=sflag, size = 0x8, scoped, tag = 'scoped memory for tpu_custom_call.1']
    #allocation6 [shape = 'u8[8192]{0}', space=vmem, size = 0x2000, scoped, tag = 'output window, operand 1']
    #allocation7 [shape = 's32[2]{0}', space=sflag, size = 0x8, scoped, tag = 'scoped memory for tpu_custom_call.1']
    %15 = vsyncpa [#allocation5], 0
    %s16 = scalar_lea.sflag [#allocation5], 1
    %17 = vsyncpa %s16, 0
    %18 = vsyncpa [#allocation7], 0
    %s19 = scalar_lea.sflag [#allocation7], 1
    %20 = vsyncpa %s19, 0
    loop: start=0, step=1, limit=4
    $region2: #{tpu_custom_call.1} parent=1 // loop_pre_header
      _
    $region3: #{tpu_custom_call.1} parent=1 // loop_header
      %s22 = sphi 0, %s26
      %p23 = scmp.ge.s32.totalorder %s22, 4
      %s29 = sphi 0, %s41
      %s30 = sphi 0, %s37
      %s31 = sphi 0, %s29
      %s32 = sphi 0, %s30
      %s33 = sphi 0, %s31
      %s34 = sphi 0, %s32
      %s46 = sphi 0, %s48
      %s49 = sphi 0, %s46
      %s50 = sphi 0, %s49
      %s66 = sphi 0, %s50
      %s72 = sphi 0, %s74
      %s75 = sphi 0, %s72
      %s76 = sphi 0, %s75
      %s92 = sphi 0, %s76
      %s96 = sphi 0, %s96
      %s98 = sphi 0, %s96
      %s99 = sphi 0, %s98
      %s113 = sphi 0, %s99
      %s117 = sphi 0, %s117
      %s119 = sphi 0, %s117
      %s120 = sphi 0, %s119
      %s134 = sphi 0, %s120
      %s138 = sphi 0, %s138
      %s140 = sphi 0, %s138
      %s141 = sphi 0, %s140
      %s155 = sphi 0, %s141
      %s159 = sphi 0, %s159
      %s161 = sphi 0, %s159
      %s162 = sphi 0, %s161
      %s176 = sphi 0, %s162
      %s180 = sphi 0, %s180
      %s182 = sphi 0, %s180
      %s183 = sphi 0, %s182
      %s197 = sphi 0, %s183
      %s201 = sphi 0, %s201
      %s203 = sphi 0, %s201
      %s204 = sphi 0, %s203
      %s218 = sphi 0, %s204
      %s226 = sphi 0, %s228
      %s229 = sphi 0, %s226
      %s230 = sphi 0, %s229
      %s246 = sphi 0, %s230
      %s254 = sphi 0, %s256
      %s257 = sphi 0, %s254
      %s258 = sphi 0, %s257
      %s274 = sphi 0, %s258
    $region4: #{tpu_custom_call.1} parent=1 // loop_header_branch
      %25 = sbr.rel (%p23) target = $region8
    $region5: #{tpu_custom_call.1} parent=1 // loop_body
      %s27 = ssub.s32 %s22, 1
      %s28 = ssub.s32 %s22, 2
      %s35 = sadd.s32 1, %s30
      %p36 = scmp.ge.s32.totalorder %s35, 1
      %s37 = scalar_select %p36, 0, %s35
      %s38 = sadd.s32 1, %s29
      %s39 = scalar_select %p36, %s38, %s29
      %p40 = scmp.ge.s32.totalorder %s39, 2
      %s41 = scalar_select %p40, 0, %s39
      %s42 = ssub.s32 %s29, %s41
      %s43 = ssub.s32 %s30, %s37
      %s44 = sor.u32 %s42, %s43
      %p45 = scmp.eq.s32.totalorder %s44, 0
      %s47 = sadd.s32 %s46, 1
      %s48 = scalar_select %p45, %s46, %s47
      %p51 = pneg %p45
      %p52 = scmp.eq.s32.totalorder %s22, 1
      %p53 = por %p51, %p52
      %p54 = scmp.ne.s32.totalorder %s46, %s49
      %p55 = scmp.eq.s32.totalorder %s22, 0
      %p56 = por %p54, %p55
      %p57 = scmp.ne.s32.totalorder %s46, %s49
      %p58 = scmp.eq.s32.totalorder %s27, 1
      %p59 = por %p57, %p58
      %p60 = scmp.ne.s32.totalorder %s49, %s50
      %p61 = scmp.eq.s32.totalorder %s27, 0
      %p62 = por %p60, %p61
      %p63 = scmp.ne.s32.totalorder %s49, %s50
      %p64 = scmp.eq.s32.totalorder %s28, 1
      %p65 = por %p63, %p64
      %p67 = scmp.ne.s32.totalorder %s50, %s66
      %p68 = scmp.eq.s32.totalorder %s28, 0
      %p69 = por %p67, %p68
      %s70 = ssub.s32 %s29, %s41
      %p71 = scmp.eq.s32.totalorder %s70, 0
      %s73 = sadd.s32 %s72, 1
      %s74 = scalar_select %p71, %s72, %s73
      %p77 = pneg %p71
      %p78 = scmp.eq.s32.totalorder %s22, 1
      %p79 = por %p77, %p78
      %p80 = scmp.ne.s32.totalorder %s72, %s75
      %p81 = scmp.eq.s32.totalorder %s22, 0
      %p82 = por %p80, %p81
      %p83 = scmp.ne.s32.totalorder %s72, %s75
      %p84 = scmp.eq.s32.totalorder %s27, 1
      %p85 = por %p83, %p84
      %p86 = scmp.ne.s32.totalorder %s75, %s76
      %p87 = scmp.eq.s32.totalorder %s27, 0
      %p88 = por %p86, %p87
      %p89 = scmp.ne.s32.totalorder %s75, %s76
      %p90 = scmp.eq.s32.totalorder %s28, 1
      %p91 = por %p89, %p90
      %p93 = scmp.ne.s32.totalorder %s76, %s92
      %p94 = scmp.eq.s32.totalorder %s28, 0
      %p95 = por %p93, %p94
      %s97 = sadd.s32 %s96, 1
      %p100 = scmp.eq.s32.totalorder %s22, 1
      %p101 = scmp.ne.s32.totalorder %s96, %s98
      %p102 = scmp.eq.s32.totalorder %s22, 0
      %p103 = por %p101, %p102
      %p104 = scmp.ne.s32.totalorder %s96, %s98
      %p105 = scmp.eq.s32.totalorder %s27, 1
      %p106 = por %p104, %p105
      %p107 = scmp.ne.s32.totalorder %s98, %s99
      %p108 = scmp.eq.s32.totalorder %s27, 0
      %p109 = por %p107, %p108
      %p110 = scmp.ne.s32.totalorder %s98, %s99
      %p111 = scmp.eq.s32.totalorder %s28, 1
      %p112 = por %p110, %p111
      %p114 = scmp.ne.s32.totalorder %s99, %s113
      %p115 = scmp.eq.s32.totalorder %s28, 0
      %p116 = por %p114, %p115
      %s118 = sadd.s32 %s117, 1
      %p121 = scmp.eq.s32.totalorder %s22, 1
      %p122 = scmp.ne.s32.totalorder %s117, %s119
      %p123 = scmp.eq.s32.totalorder %s22, 0
      %p124 = por %p122, %p123
      %p125 = scmp.ne.s32.totalorder %s117, %s119
      %p126 = scmp.eq.s32.totalorder %s27, 1
      %p127 = por %p125, %p126
      %p128 = scmp.ne.s32.totalorder %s119, %s120
      %p129 = scmp.eq.s32.totalorder %s27, 0
      %p130 = por %p128, %p129
      %p131 = scmp.ne.s32.totalorder %s119, %s120
      %p132 = scmp.eq.s32.totalorder %s28, 1
      %p133 = por %p131, %p132
      %p135 = scmp.ne.s32.totalorder %s120, %s134
      %p136 = scmp.eq.s32.totalorder %s28, 0
      %p137 = por %p135, %p136
      %s139 = sadd.s32 %s138, 1
      %p142 = scmp.eq.s32.totalorder %s22, 1
      %p143 = scmp.ne.s32.totalorder %s138, %s140
      %p144 = scmp.eq.s32.totalorder %s22, 0
      %p145 = por %p143, %p144
      %p146 = scmp.ne.s32.totalorder %s138, %s140
      %p147 = scmp.eq.s32.totalorder %s27, 1
      %p148 = por %p146, %p147
      %p149 = scmp.ne.s32.totalorder %s140, %s141
      %p150 = scmp.eq.s32.totalorder %s27, 0
      %p151 = por %p149, %p150
      %p152 = scmp.ne.s32.totalorder %s140, %s141
      %p153 = scmp.eq.s32.totalorder %s28, 1
      %p154 = por %p152, %p153
      %p156 = scmp.ne.s32.totalorder %s141, %s155
      %p157 = scmp.eq.s32.totalorder %s28, 0
      %p158 = por %p156, %p157
      %s160 = sadd.s32 %s159, 1
      %p163 = scmp.eq.s32.totalorder %s22, 1
      %p164 = scmp.ne.s32.totalorder %s159, %s161
      %p165 = scmp.eq.s32.totalorder %s22, 0
      %p166 = por %p164, %p165
      %p167 = scmp.ne.s32.totalorder %s159, %s161
      %p168 = scmp.eq.s32.totalorder %s27, 1
      %p169 = por %p167, %p168
      %p170 = scmp.ne.s32.totalorder %s161, %s162
      %p171 = scmp.eq.s32.totalorder %s27, 0
      %p172 = por %p170, %p171
      %p173 = scmp.ne.s32.totalorder %s161, %s162
      %p174 = scmp.eq.s32.totalorder %s28, 1
      %p175 = por %p173, %p174
      %p177 = scmp.ne.s32.totalorder %s162, %s176
      %p178 = scmp.eq.s32.totalorder %s28, 0
      %p179 = por %p177, %p178
      %s181 = sadd.s32 %s180, 1
      %p184 = scmp.eq.s32.totalorder %s22, 1
      %p185 = scmp.ne.s32.totalorder %s180, %s182
      %p186 = scmp.eq.s32.totalorder %s22, 0
      %p187 = por %p185, %p186
      %p188 = scmp.ne.s32.totalorder %s180, %s182
      %p189 = scmp.eq.s32.totalorder %s27, 1
      %p190 = por %p188, %p189
      %p191 = scmp.ne.s32.totalorder %s182, %s183
      %p192 = scmp.eq.s32.totalorder %s27, 0
      %p193 = por %p191, %p192
      %p194 = scmp.ne.s32.totalorder %s182, %s183
      %p195 = scmp.eq.s32.totalorder %s28, 1
      %p196 = por %p194, %p195
      %p198 = scmp.ne.s32.totalorder %s183, %s197
      %p199 = scmp.eq.s32.totalorder %s28, 0
      %p200 = por %p198, %p199
      %s202 = sadd.s32 %s201, 1
      %p205 = scmp.eq.s32.totalorder %s22, 1
      %p206 = scmp.ne.s32.totalorder %s201, %s203
      %p207 = scmp.eq.s32.totalorder %s22, 0
      %p208 = por %p206, %p207
      %p209 = scmp.ne.s32.totalorder %s201, %s203
      %p210 = scmp.eq.s32.totalorder %s27, 1
      %p211 = por %p209, %p210
      %p212 = scmp.ne.s32.totalorder %s203, %s204
      %p213 = scmp.eq.s32.totalorder %s27, 0
      %p214 = por %p212, %p213
      %p215 = scmp.ne.s32.totalorder %s203, %s204
      %p216 = scmp.eq.s32.totalorder %s28, 1
      %p217 = por %p215, %p216
      %p219 = scmp.ne.s32.totalorder %s204, %s218
      %p220 = scmp.eq.s32.totalorder %s28, 0
      %p221 = por %p219, %p220
      %s222 = ssub.s32 %s29, %s41
      %s223 = ssub.s32 %s30, %s37
      %s224 = sor.u32 %s222, %s223
      %p225 = scmp.eq.s32.totalorder %s224, 0
      %s227 = sadd.s32 %s226, 1
      %s228 = scalar_select %p225, %s226, %s227
      %p231 = pneg %p225
      %p232 = scmp.eq.s32.totalorder %s22, 1
      %p233 = por %p231, %p232
      %p234 = scmp.ne.s32.totalorder %s226, %s229
      %p235 = scmp.eq.s32.totalorder %s22, 0
      %p236 = por %p234, %p235
      %p237 = scmp.ne.s32.totalorder %s226, %s229
      %p238 = scmp.eq.s32.totalorder %s27, 1
      %p239 = por %p237, %p238
      %p240 = scmp.ne.s32.totalorder %s229, %s230
      %p241 = scmp.eq.s32.totalorder %s27, 0
      %p242 = por %p240, %p241
      %p243 = scmp.ne.s32.totalorder %s229, %s230
      %p244 = scmp.eq.s32.totalorder %s28, 1
      %p245 = por %p243, %p244
      %p247 = scmp.ne.s32.totalorder %s230, %s246
      %p248 = scmp.eq.s32.totalorder %s28, 0
      %p249 = por %p247, %p248
      %s250 = ssub.s32 %s29, %s41
      %s251 = ssub.s32 %s30, %s37
      %s252 = sor.u32 %s250, %s251
      %p253 = scmp.eq.s32.totalorder %s252, 0
      %s255 = sadd.s32 %s254, 1
      %s256 = scalar_select %p253, %s254, %s255
      %p259 = pneg %p253
      %p260 = scmp.eq.s32.totalorder %s22, 1
      %p261 = por %p259, %p260
      %p262 = scmp.ne.s32.totalorder %s254, %s257
      %p263 = scmp.eq.s32.totalorder %s22, 0
      %p264 = por %p262, %p263
      %p265 = scmp.ne.s32.totalorder %s254, %s257
      %p266 = scmp.eq.s32.totalorder %s27, 1
      %p267 = por %p265, %p266
      %p268 = scmp.ne.s32.totalorder %s257, %s258
      %p269 = scmp.eq.s32.totalorder %s27, 0
      %p270 = por %p268, %p269
      %p271 = scmp.ne.s32.totalorder %s257, %s258
      %p272 = scmp.eq.s32.totalorder %s28, 1
      %p273 = por %p271, %p272
      %p275 = scmp.ne.s32.totalorder %s258, %s274
      %p276 = scmp.eq.s32.totalorder %s28, 0
      %p277 = por %p275, %p276
      %p278 = scmp.le.s32.totalorder 1, %s22
      %p279 = scmp.lt.s32.totalorder %s22, 3
      %p280 = pnand %p278, %p279
      %p281 = pneg %p280
      // Predicated region
      $region9: #{tpu_custom_call.1} parent=5 // pred_check
        _
      $region10: #{tpu_custom_call.1} parent=5 // pred_check_branch
        %283 = sbr.rel (%p280) target = $region12
      $region11: #{tpu_custom_call.1} parent=5 // pred_region
        %s284 = ssub.s32 %s22, 1
        // Predicated region
        $region13: #{tpu_custom_call.1} parent=11 // pred_check
          %p285 = pneg %p109
        $region14: #{tpu_custom_call.1} parent=11 // pred_check_branch
          %287 = sbr.rel (%p285) target = $region16
        $region15: #{tpu_custom_call.1} parent=11 // pred_region
          _
        $region16: #{tpu_custom_call.1} parent=11 // pred_fallthru
          _
        // Predicated region
        $region17: #{tpu_custom_call.1} parent=11 // pred_check
          %p288 = pneg %p130
        $region18: #{tpu_custom_call.1} parent=11 // pred_check_branch
          %290 = sbr.rel (%p288) target = $region20
        $region19: #{tpu_custom_call.1} parent=11 // pred_region
          _
        $region20: #{tpu_custom_call.1} parent=11 // pred_fallthru
          _
        // Predicated region
        $region21: #{tpu_custom_call.1} parent=11 // pred_check
          %p291 = pneg %p151
        $region22: #{tpu_custom_call.1} parent=11 // pred_check_branch
          %293 = sbr.rel (%p291) target = $region24
        $region23: #{tpu_custom_call.1} parent=11 // pred_region
          _
        $region24: #{tpu_custom_call.1} parent=11 // pred_fallthru
          _
        // Predicated region
        $region25: #{tpu_custom_call.1} parent=11 // pred_check
          %p294 = pneg %p172
        $region26: #{tpu_custom_call.1} parent=11 // pred_check_branch
          %296 = sbr.rel (%p294) target = $region28
        $region27: #{tpu_custom_call.1} parent=11 // pred_region
          _
        $region28: #{tpu_custom_call.1} parent=11 // pred_fallthru
          _
        // Predicated region
        $region29: #{tpu_custom_call.1} parent=11 // pred_check
          %p297 = pneg %p193
        $region30: #{tpu_custom_call.1} parent=11 // pred_check_branch
          %299 = sbr.rel (%p297) target = $region32
        $region31: #{tpu_custom_call.1} parent=11 // pred_region
          _
        $region32: #{tpu_custom_call.1} parent=11 // pred_fallthru
          _
        // Predicated region
        $region33: #{tpu_custom_call.1} parent=11 // pred_check
          %p300 = pneg %p214
        $region34: #{tpu_custom_call.1} parent=11 // pred_check_branch
          %302 = sbr.rel (%p300) target = $region36
        $region35: #{tpu_custom_call.1} parent=11 // pred_region
          _
        $region36: #{tpu_custom_call.1} parent=11 // pred_fallthru
          _
      $region12: #{tpu_custom_call.1} parent=5 // pred_fallthru
        _
      %p303 = scmp.lt.s32.totalorder %s22, 2
      // Predicated region
      $region37: #{tpu_custom_call.1} parent=5 // pred_check
        %p304 = pneg %p303
      $region38: #{tpu_custom_call.1} parent=5 // pred_check_branch
        %306 = sbr.rel (%p304) target = $region40
      $region39: #{tpu_custom_call.1} parent=5 // pred_region
        // Predicated region
        $region41: #{tpu_custom_call.1} parent=39 // pred_check
          %p307 = pneg %p56
        $region42: #{tpu_custom_call.1} parent=39 // pred_check_branch
          %309 = sbr.rel (%p307) target = $region44
        $region43: #{tpu_custom_call.1} parent=39 // pred_region
          %p310 = scmp.lt.s32.totalorder %s29, 1
          %s311 = scalar_select %p310, %s29, 1
          %p312 = scmp.lt.s32.totalorder %s30, 0
          %s313 = scalar_select %p312, %s30, 0
          %s314 = sadd.s32 %s313, %s311
          %s315 = smul.addr %s314, 4
          %s316 = scalar_lea.vmem %s0, %s315
        $region44: #{tpu_custom_call.1} parent=39 // pred_fallthru
          _
        // Predicated region
        $region45: #{tpu_custom_call.1} parent=39 // pred_check
          %p317 = pneg %p82
        $region46: #{tpu_custom_call.1} parent=39 // pred_check_branch
          %319 = sbr.rel (%p317) target = $region48
        $region47: #{tpu_custom_call.1} parent=39 // pred_region
          %p320 = scmp.lt.s32.totalorder %s29, 1
          %s321 = scalar_select %p320, %s29, 1
          %s322 = smul.addr %s321, 4
          %s323 = scalar_lea.vmem %s1, %s322
        $region48: #{tpu_custom_call.1} parent=39 // pred_fallthru
          _
      $region40: #{tpu_custom_call.1} parent=5 // pred_fallthru
        _
      %p324 = scmp.le.s32.totalorder 1, %s22
      %p325 = scmp.lt.s32.totalorder %s22, 3
      %p326 = pnand %p324, %p325
      %p327 = pneg %p326
      // Predicated region
      $region49: #{tpu_custom_call.1} parent=5 // pred_check
        _
      $region50: #{tpu_custom_call.1} parent=5 // pred_check_branch
        %329 = sbr.rel (%p326) target = $region52
      $region51: #{tpu_custom_call.1} parent=5 // pred_region
        %s330 = ssub.s32 %s22, 1
        %p331 = scmp.lt.s32.totalorder %s31, 1
        %s332 = scalar_select %p331, %s31, 1
        %p333 = scmp.lt.s32.totalorder %s32, 0
        %s334 = scalar_select %p333, %s32, 0
        %s335 = sadd.s32 %s334, %s332
        %s336 = smul.addr %s335, 4
        %s337 = scalar_lea.vmem %s0, %s336
        %p338 = pneg %p62
        %p339 = pneg %p59
        %p340 = scmp.lt.s32.totalorder %s31, 1
        %s341 = scalar_select %p340, %s31, 1
        %s342 = smul.addr %s341, 4
        %s343 = scalar_lea.vmem %s1, %s342
        %p344 = pneg %p88
        %p345 = pneg %p85
        %p346 = pneg %p109
        %p347 = pneg %p106
        %p348 = pneg %p130
        %p349 = pneg %p127
        %p350 = pneg %p151
        %p351 = pneg %p148
        %p352 = pneg %p172
        %p353 = pneg %p169
        %p354 = pneg %p193
        %p355 = pneg %p190
        %p356 = pneg %p214
        %p357 = pneg %p211
        %p358 = pneg %p242
        %p359 = pneg %p239
        %s360 = sand.u32 %s229, 1
        %s361 = scalar_lea.sflag [#allocation5], %s360
        %s362 = sand.u32 %s229, 1
        %s363 = smul.addr %s362, 8
        %s364 = scalar_lea.vmem [#allocation4], %s363
        %p365 = pneg %p270
        %p366 = pneg %p267
        %s367 = sand.u32 %s257, 1
        %s368 = scalar_lea.sflag [#allocation7], %s367
        %s369 = sand.u32 %s257, 1
        %s370 = smul.addr %s369, 8
        %s371 = scalar_lea.vmem [#allocation6], %s370
        %p372 = scmp.lt.s32.totalorder %s31, 1
        %s373 = scalar_select %p372, %s31, 1
        %p374 = scmp.lt.s32.totalorder %s32, 0
        %s375 = scalar_select %p374, %s32, 0
        %s376 = sadd.s32 %s375, %s373
        %s377 = smul.addr %s376, 4
        %s378 = scalar_lea.vmem %s0, %s377
        %p379 = scmp.lt.s32.totalorder %s31, 1
        %s380 = scalar_select %p379, %s31, 1
        %s381 = smul.addr %s380, 4
        %s382 = scalar_lea.vmem %s1, %s381
        %p384 = scmp.eq.s32.totalorder %s32, 0
        // Predicated region
        $region53: #{tpu_custom_call.1} parent=51 // pred_check
          %p385 = pneg %p384
        $region54: #{tpu_custom_call.1} parent=51 // pred_check_branch
          %387 = sbr.rel (%p385) target = $region56
        $region55: #{tpu_custom_call.1} parent=51 // pred_region
          %v388 = vld [vmem:[%s382] sm:$0xf]
          %v389 = vld [vmem:[%s4] sm:$0xf]
          %v390 = vld [vmem:[%s4 + $0x4] sm:$0xf]
          %v391 = vld [vmem:[%s4 + $0x8] sm:$0xf]
          %v392 = vld [vmem:[%s4 + $0xc] sm:$0xf]
          %v393 = vld [vmem:[%s5] sm:$0x1]
          %v395 = vperm.slane %v393, 0
          %v401 = vunpack.c.l.b16 %v389
          %v402 = vunpack.c.l.b16 %v390
          %v403 = vunpack.c.l.b16 %v391
          %v404 = vunpack.c.l.b16 %v392
          %v405 = vpack.c.b16 %v402, %v401
          %v406 = vpack.c.b16 %v404, %v403
          %vm409 = vcmask 261120
          %v411 = vsel %vm409, %v388, 0
          %413 = vmatpush.bf16.msra.mxu0 0
          %414 = vmatpush.bf16.msra.mxu0 0
          %415 = vmatpush.bf16.msra.mxu0 0
          %416 = vmatpush.bf16.msra.mxu0 0
          %417 = vmatpush.bf16.msra.mxu0 0
          %418 = vmatpush.bf16.msra.mxu0 0
          %419 = vmatpush.bf16.msra.mxu0 %v406
          %420 = vmatpush.bf16.msra.mxu0 %v405
          %421 = vmatmul.bf16.gmra.mxu0 %v411
          %v422 = vpop.f32.mrf.mxu0
          %v423 = vadd.f32 %v395, %v422
          %v424 = vpop.f32.mrf.mxu0
          %425 = vdwg.mxu0
          %v426 = vld [vmem:[%s6] sm:$0xf]
          %v427 = vld [vmem:[%s6 + $0x4] sm:$0xf]
          %v428 = vld [vmem:[%s6 + $0x8] sm:$0xf]
          %v429 = vld [vmem:[%s6 + $0xc] sm:$0xf]
          %v430 = vld [vmem:[%s7] sm:$0x1]
          %v432 = vperm.slane %v430, 0
          %v438 = vunpack.c.l.b16 %v426
          %v439 = vunpack.c.l.b16 %v427
          %v440 = vunpack.c.l.b16 %v428
          %v441 = vunpack.c.l.b16 %v429
          %v442 = vpack.c.b16 %v439, %v438
          %v443 = vpack.c.b16 %v441, %v440
          %446 = vmatpush.bf16.msra.mxu0 0
          %447 = vmatpush.bf16.msra.mxu0 0
          %448 = vmatpush.bf16.msra.mxu0 0
          %449 = vmatpush.bf16.msra.mxu0 0
          %450 = vmatpush.bf16.msra.mxu0 0
          %451 = vmatpush.bf16.msra.mxu0 0
          %452 = vmatpush.bf16.msra.mxu0 %v443
          %453 = vmatpush.bf16.msra.mxu0 %v442
          %454 = vmatmul.bf16.gmra.mxu0 %v411
          %v455 = vpop.f32.mrf.mxu0
          %v456 = vadd.f32 %v432, %v455
          %v457 = vpop.f32.mrf.mxu0
          %458 = vdwg.mxu0
          %v459 = vpack.c.bf16 %v423, %v423
          %vm460 = vcmask 125952
          %461 = vst.msk [vmem:[#allocation2] sm:$0xf] %vm460, %v459
          %v462 = vpack.c.bf16 %v456, %v456
          %vm463 = vcmask 257024
          %464 = vst.msk [vmem:[#allocation3] sm:$0xf] %vm463, %v462
        $region56: #{tpu_custom_call.1} parent=51 // pred_fallthru
          _
        %v465 = vld [vmem:[%s378] sm:$0xf]
        %v466 = vld [vmem:[%s2] sm:$0xf]
        %v467 = vld [vmem:[%s2 + $0x4] sm:$0xf]
        %v468 = vld [vmem:[%s2 + $0x8] sm:$0xf]
        %v469 = vld [vmem:[%s2 + $0xc] sm:$0xf]
        %v470 = vld [vmem:[%s3] sm:$0x1]
        %v472 = vperm.slane %v470, 0
        %v478 = vunpack.c.l.b16 %v466
        %v479 = vunpack.c.l.b16 %v467
        %v480 = vunpack.c.l.b16 %v468
        %v481 = vunpack.c.l.b16 %v469
        %v482 = vpack.c.b16 %v479, %v478
        %v483 = vpack.c.b16 %v481, %v480
        %vm486 = vcmask 261120
        %v488 = vsel %vm486, %v465, 0
        %490 = vmatpush.bf16.msra.mxu0 0
        %491 = vmatpush.bf16.msra.mxu0 0
        %492 = vmatpush.bf16.msra.mxu0 0
        %493 = vmatpush.bf16.msra.mxu0 0
        %494 = vmatpush.bf16.msra.mxu0 0
        %495 = vmatpush.bf16.msra.mxu0 0
        %496 = vmatpush.bf16.msra.mxu0 %v483
        %497 = vmatpush.bf16.msra.mxu0 %v482
        %498 = vmatmul.bf16.gmra.mxu0 %v488
        %v499 = vpop.f32.mrf.mxu0
        %v500 = vadd.f32 %v472, %v499
        %v501 = vpop.f32.mrf.mxu0
        %502 = vdwg.mxu0
        %v503 = vpack.c.bf16 %v500, %v500
        %v504 = vld [vmem:[#allocation2] sm:$0xf]
        %vm505 = vcmask 130048
        %v507 = vsel %vm505, %v503, 0
        %v510 = vsel %vm505, %v504, 0
        %512 = vmatpush.bf16.xpose.msra.mxu0 0
        %513 = vmatpush.bf16.xpose.msra.mxu0 0
        %514 = vmatpush.bf16.xpose.msra.mxu0 0
        %515 = vmatpush.bf16.xpose.msra.mxu0 0
        %516 = vmatpush.bf16.xpose.msra.mxu0 0
        %517 = vmatpush.bf16.xpose.msra.mxu0 0
        %518 = vmatpush.bf16.xpose.msra.mxu0 0
        %519 = vmatpush.bf16.xpose.msra.mxu0 %v510
        %520 = vmatmul.bf16.gmra.mxu0 %v507
        %v521 = vpop.f32.mrf.mxu0
        %v522 = vadd.f32 0.0, %v521
        %v523 = vpop.f32.mrf.mxu0
        %524 = vdwg.mxu0
        %vm525 = vcmask 64512
        %v526 = vsel %vm525, %v522, -inf
        %527 = vmax.xlane.f32.xlu0 %v526
        %v528 = vpop.xlane.xlu0 %527
        %v529 = vsub.f32 %v522, %v528
        %v530 = vmul.f32 %v529, 1.442695
        %v531 = vpow.pop %v530
        %v532 = vsel %vm525, %v531, 0.0
        %533 = vadd.xlane.f32.xlu0 %v532
        %v534 = vpop.xlane.xlu0 %533
        %v535 = vrcp.pop %v534
        %v536 = vmul.f32 %v534, %v535
        %v537 = vsub.f32 1.0, %v536
        %v538 = vmul.f32 %v535, %v537
        %v539 = vadd.f32 %v535, %v538
        %vm540 = vweird.f32 %v534
        %vm541 = vweird.f32 %v535
        %vm542 = vmor %vm540, %vm541
        %v543 = vsel %vm542, %v535, %v539
        %v544 = vand.u32 2147483647, %v534
        %vm545 = vcmp.eq.f32.partialorder %v544, 8.507059e+37
        %v546 = vand.u32 %v534, 2147483648
        %v547 = vor.u32 1.1754944e-38, %v546
        %v548 = vsel %vm545, %v547, %v543
        %v549 = vmul.f32 %v531, %v548
        %v550 = vpack.c.bf16 %v549, %v549
        %v551 = vld [vmem:[#allocation3] sm:$0xf]
        %v553 = vsel %vm525, %v550, 0
        %vm555 = vcmask 1043456
        %v557 = vsel %vm555, %v551, 0
        %559 = vmatpush.bf16.msra.mxu0 0
        %560 = vmatpush.bf16.msra.mxu0 0
        %561 = vmatpush.bf16.msra.mxu0 0
        %562 = vmatpush.bf16.msra.mxu0 0
        %563 = vmatpush.bf16.msra.mxu0 0
        %564 = vmatpush.bf16.msra.mxu0 0
        %565 = vmatpush.bf16.msra.mxu0 0
        %566 = vmatpush.bf16.msra.mxu0 %v557
        %567 = vmatmul.bf16.gmra.mxu0 %v553
        %v568 = vpop.f32.mrf.mxu0
        %v569 = vadd.f32 0.0, %v568
        %v570 = vpop.f32.mrf.mxu0
        %571 = vdwg.mxu0
        %572 = vst.msk [vmem:[%s364] sm:$0xff] %vm525, %v549
        %573 = vst.msk [vmem:[%s371] sm:$0xff] %vm486, %v569
        %s574 = sand.u32 %s229, 1
        %s575 = scalar_lea.sflag [#allocation5], %s574
        %s576 = sand.u32 %s229, 1
        %s577 = smul.addr %s576, 8
        %s578 = scalar_lea.vmem [#allocation4], %s577
        %s579 = sand.u32 %s257, 1
        %s580 = scalar_lea.sflag [#allocation7], %s579
        %s581 = sand.u32 %s257, 1
        %s582 = smul.addr %s581, 8
        %s583 = scalar_lea.vmem [#allocation6], %s582
        // Predicated region
        $region57: #{tpu_custom_call.1} parent=51 // pred_check
          %p584 = pneg %p239
        $region58: #{tpu_custom_call.1} parent=51 // pred_check_branch
          %586 = sbr.rel (%p584) target = $region60
        $region59: #{tpu_custom_call.1} parent=51 // pred_region
          %588 = vsyncadd %s575, 0
          %s589 = sadd.s32 %s32, %s31
          %s590 = smul.addr %s589, 8
          %s591 = scalar_lea.hbm %s8, %s590
          %s593 = sshll.u32 %s578, 4
          %s594 = int_to_ptr.vmem [resolvable:$true] %s593
          %s595 = sshll.u32 %s591, 4
          %s596 = int_to_ptr.hbm [resolvable:$true] %s595
          %598 = dma.vmem_to_hbm [thread:$0]  %s594, 128, %s596, %s575
        $region60: #{tpu_custom_call.1} parent=51 // pred_fallthru
          _
        // Predicated region
        $region61: #{tpu_custom_call.1} parent=51 // pred_check
          %p599 = pneg %p267
        $region62: #{tpu_custom_call.1} parent=51 // pred_check_branch
          %601 = sbr.rel (%p599) target = $region64
        $region63: #{tpu_custom_call.1} parent=51 // pred_region
          %603 = vsyncadd %s580, 0
          %s604 = sadd.s32 %s32, %s31
          %s605 = smul.addr %s604, 8
          %s606 = scalar_lea.hbm %s9, %s605
          %s608 = sshll.u32 %s583, 4
          %s609 = int_to_ptr.vmem [resolvable:$true] %s608
          %s610 = sshll.u32 %s606, 4
          %s611 = int_to_ptr.hbm [resolvable:$true] %s610
          %613 = dma.vmem_to_hbm [thread:$0]  %s609, 128, %s611, %s580
        $region64: #{tpu_custom_call.1} parent=51 // pred_fallthru
          _
      $region52: #{tpu_custom_call.1} parent=5 // pred_fallthru
        _
      %p614 = scmp.le.s32.totalorder 2, %s22
      // Predicated region
      $region65: #{tpu_custom_call.1} parent=5 // pred_check
        %p615 = pneg %p614
      $region66: #{tpu_custom_call.1} parent=5 // pred_check_branch
        %617 = sbr.rel (%p615) target = $region68
      $region67: #{tpu_custom_call.1} parent=5 // pred_region
        %s618 = ssub.s32 %s22, 2
        // Predicated region
        $region69: #{tpu_custom_call.1} parent=67 // pred_check
          %p619 = pneg %p245
        $region70: #{tpu_custom_call.1} parent=67 // pred_check_branch
          %621 = sbr.rel (%p619) target = $region72
        $region71: #{tpu_custom_call.1} parent=67 // pred_region
          %s622 = sand.u32 %s230, 1
          %s623 = scalar_lea.sflag [#allocation5], %s622
          %s624 = sand.u32 %s230, 1
          %s625 = smul.addr %s624, 8
          %s626 = scalar_lea.vmem [#allocation4], %s625
          %628 = dma.done %s623, 128
        $region72: #{tpu_custom_call.1} parent=67 // pred_fallthru
          _
        // Predicated region
        $region73: #{tpu_custom_call.1} parent=67 // pred_check
          %p629 = pneg %p273
        $region74: #{tpu_custom_call.1} parent=67 // pred_check_branch
          %631 = sbr.rel (%p629) target = $region76
        $region75: #{tpu_custom_call.1} parent=67 // pred_region
          %s632 = sand.u32 %s258, 1
          %s633 = scalar_lea.sflag [#allocation7], %s632
          %s634 = sand.u32 %s258, 1
          %s635 = smul.addr %s634, 8
          %s636 = scalar_lea.vmem [#allocation6], %s635
          %638 = dma.done %s633, 128
        $region76: #{tpu_custom_call.1} parent=67 // pred_fallthru
          _
      $region68: #{tpu_custom_call.1} parent=5 // pred_fallthru
        _
    $region6: #{tpu_custom_call.1} parent=1 // loop_footer
      %s26 = sadd.s32 1, %s22
    $region7: #{tpu_custom_call.1} parent=1 // loop_footer_branch
      %21 = sbr.rel target = $region3
    $region8: #{tpu_custom_call.1} parent=1 // loop_exit
      _
    %639 = vsyncpa [#allocation5], 1
    %s640 = scalar_lea.sflag [#allocation5], 1
    %641 = vsyncpa %s640, 1
    %642 = vsyncpa [#allocation7], 1
    %s643 = scalar_lea.sflag [#allocation7], 1
    %644 = vsyncpa %s643, 1

</llo_original>
